<compile_context>
chip_gen: v7x
topology: tpu7x:2x2x1
jax: 0.10.0
libtpu: 0.0.40
codegen_flags: <defaults>
</compile_context>

<pallas_src>
import functools

import jax
import jax.numpy as jnp
from jax.experimental import pallas as pl
from jax.experimental.pallas import tpu as pltpu

LN_EPS = 1e-5                      # torch.nn.LayerNorm default
_VMEM_BUDGET = 40 * 1024 * 1024    # conservative: fits v7x 64 MiB physical VMEM
_VMEM_LIMIT_CAP = 56 * 1024 * 1024


def _round_up(x, m):
    return ((x + m - 1) // m) * m


# --------------------------------------------------------------------------- #
# In-kernel helpers (trace-time inlined)
# --------------------------------------------------------------------------- #
def _layernorm_f32(x_ref, gamma_ref, beta_ref):
    x = x_ref[...].astype(jnp.float32)                              # (tm, dim)
    mean = jnp.mean(x, axis=-1, keepdims=True)
    centered = x - mean
    var = jnp.mean(centered * centered, axis=-1, keepdims=True)     # biased, like torch
    xn = centered * jax.lax.rsqrt(var + LN_EPS)
    return xn * gamma_ref[...].astype(jnp.float32) + beta_ref[...].astype(jnp.float32)


def _gelu_exact(h):
    # Exact (erf-based) GELU in f32, matching torch.nn.GELU() default.
    return 0.5 * h * (1.0 + jax.lax.erf(h * jnp.float32(0.7071067811865476)))


# --------------------------------------------------------------------------- #
# Kernels
# --------------------------------------------------------------------------- #
def _ff_kernel_fused(x_ref, gamma_ref, beta_ref, w1_ref, b1_ref, w2_ref, b2_ref,
                     o_ref):
    """1-D grid over row tiles; full hidden dim processed in one shot."""
    xn = _layernorm_f32(x_ref, gamma_ref, beta_ref).astype(w1_ref.dtype)
    h = jnp.dot(xn, w1_ref[...], preferred_element_type=jnp.float32)
    h = _gelu_exact(h + b1_ref[...].astype(jnp.float32))
    # Dropout(p=0.0) is the identity; skipped.
    out = jnp.dot(h.astype(w2_ref.dtype), w2_ref[...],
                  preferred_element_type=jnp.float32)
    o_ref[...] = (out + b2_ref[...].astype(jnp.float32)).astype(o_ref.dtype)


def _ff_kernel_chunked(x_ref, gamma_ref, beta_ref, w1_ref, b1_ref, w2_ref, b2_ref,
                       o_ref, xn_ref, acc_ref):
    """Grid = (row_tiles, hidden_chunks). Hidden axis is the reduction axis."""
    k = pl.program_id(1)
    last_k = pl.num_programs(1) - 1

    # LayerNorm once per row tile; cache normalized activations + zero the acc.
    @pl.when(k == 0)
    def _():
        xn_ref[...] = _layernorm_f32(x_ref, gamma_ref, beta_ref).astype(xn_ref.dtype)
        acc_ref[...] = jnp.zeros_like(acc_ref)

    # Linear(dim -> hidden_chunk) on the MXU (f32 accumulation).
    h = jnp.dot(xn_ref[...], w1_ref[...], preferred_element_type=jnp.float32)
    h = _gelu_exact(h + b1_ref[...].astype(jnp.float32))           # (tm, nk)

    # Dropout(p=0.0) is the identity; skipped.

    # Linear(hidden_chunk -> dim): accumulate into the resident f32 scratch.
    acc_ref[...] += jnp.dot(h.astype(w2_ref.dtype), w2_ref[...],
                            preferred_element_type=jnp.float32)

    @pl.when(k == last_k)
    def _():
        out = acc_ref[...] + b2_ref[...].astype(jnp.float32)
        o_ref[...] = out.astype(o_ref.dtype)


# --------------------------------------------------------------------------- #
# VMEM footprint model + chunk selection
# --------------------------------------------------------------------------- #
def _vmem_estimate(tm, dim, nk, bx, bm, chunked):
    est = (2 * tm * dim * bx          # x tiles (double-buffered)
           + 2 * tm * dim * bx        # output tiles
           + 2 * dim * nk * bm        # W1 tiles
           + 2 * nk * dim * bm        # W2 tiles
           + 2 * 2 * dim * 4          # gamma, beta (f32)
           + 2 * (nk + dim) * 4)      # b1 chunk, b2 (f32)
    if chunked:
        est += tm * dim * bm          # cached LayerNorm output
        est += tm * dim * 4           # f32 accumulator
    return est


def _pick_hidden_chunk(dim, hidden, tm, bx, bm, budget):
    # Prefer no chunking: weights stay VMEM-resident and are fetched once.
    if _vmem_estimate(tm, dim, hidden, bx, bm, chunked=False) <= budget:
        return hidden
    # Otherwise: largest lane-aligned (multiple-of-128) chunk that fits.
    nk = 128
    while True:
        cand = nk + 128
        if cand >= hidden:
            break
        if _vmem_estimate(tm, dim, cand, bx, bm, chunked=True) > budget:
            break
        nk = cand
    return nk


# --------------------------------------------------------------------------- #
# Wrapper
# --------------------------------------------------------------------------- #
@functools.partial(jax.jit,
                   static_argnames=("block_rows", "hidden_chunk", "matmul_dtype"))
def feed_forward(x, gamma, beta, w1, b1, w2, b2, *,
                 block_rows=256, hidden_chunk=None, matmul_dtype=jnp.float32):
    """x: (batch, seq, dim). Returns (batch, seq, dim)."""
    batch, seq, dim = x.shape
    hidden = w1.shape[1]
    rows = batch * seq

    bx = jnp.dtype(x.dtype).itemsize
    bm = jnp.dtype(matmul_dtype).itemsize

    # --- row tiling (pad tokens to a multiple of the row tile) ---
    block_rows = _round_up(max(block_rows, 8), 8)
    tm = min(block_rows, _round_up(rows, 8))
    rows_p = _round_up(rows, tm)

    # --- hidden tiling (adaptive unless overridden) ---
    if hidden_chunk is None:
        nk = _pick_hidden_chunk(dim, hidden, tm, bx, bm, _VMEM_BUDGET)
    else:
        nk = _round_up(max(hidden_chunk, 128), 128)
        nk = hidden if nk >= hidden else nk
    if nk >= hidden:
        nk = hidden
        hidden_p = hidden
        chunked = False
    else:
        hidden_p = _round_up(hidden, nk)
        chunked = True

    # --- prepare (padded) operands ---
    x2d = x.reshape(rows, dim)
    if rows_p != rows:
        x2d = jnp.pad(x2d, ((0, rows_p - rows), (0, 0)))

    w1p = w1.astype(matmul_dtype)
    w2p = w2.astype(matmul_dtype)
    b1p = b1
    if hidden_p != hidden:
        # Zero-padded hidden columns: h = 0, GELU(0) = 0 -> no output contribution.
        w1p = jnp.pad(w1p, ((0, 0), (0, hidden_p - hidden)))
        b1p = jnp.pad(b1p, ((0, hidden_p - hidden),))
        w2p = jnp.pad(w2p, ((0, hidden_p - hidden), (0, 0)))

    gamma2d = gamma.reshape(1, dim)
    beta2d = beta.reshape(1, dim)
    b1_2d = b1p.reshape(1, hidden_p)
    b2_2d = b2.reshape(1, dim)

    # --- VMEM limit derived from the actual tile footprint ---
    est = _vmem_estimate(tm, dim, nk, bx, bm, chunked)
    vmem_limit = max(32 * 1024 * 1024,
                     min(int(est * 5 // 4) + (1 << 20), _VMEM_LIMIT_CAP))

    if not chunked:
        grid_spec = pltpu.PrefetchScalarGridSpec(
            num_scalar_prefetch=0,
            grid=(rows_p // tm,),
            in_specs=[
                pl.BlockSpec((tm, dim), lambda i: (i, 0)),       # x tile
                pl.BlockSpec((1, dim), lambda i: (0, 0)),        # gamma
                pl.BlockSpec((1, dim), lambda i: (0, 0)),        # beta
                pl.BlockSpec((dim, hidden_p), lambda i: (0, 0)),  # W1 (resident)
                pl.BlockSpec((1, hidden_p), lambda i: (0, 0)),   # b1
                pl.BlockSpec((hidden_p, dim), lambda i: (0, 0)),  # W2 (resident)
                pl.BlockSpec((1, dim), lambda i: (0, 0)),        # b2
            ],
            out_specs=pl.BlockSpec((tm, dim), lambda i: (i, 0)),
        )
        kernel = _ff_kernel_fused
        dim_sem = ("parallel",)
    else:
        grid_spec = pltpu.PrefetchScalarGridSpec(
            num_scalar_prefetch=0,
            grid=(rows_p // tm, hidden_p // nk),
            in_specs=[
                pl.BlockSpec((tm, dim), lambda i, k: (i, 0)),    # x tile
                pl.BlockSpec((1, dim), lambda i, k: (0, 0)),     # gamma
                pl.BlockSpec((1, dim), lambda i, k: (0, 0)),     # beta
                pl.BlockSpec((dim, nk), lambda i, k: (0, k)),    # W1 column chunk
                pl.BlockSpec((1, nk), lambda i, k: (0, k)),      # b1 chunk
                pl.BlockSpec((nk, dim), lambda i, k: (k, 0)),    # W2 row chunk
                pl.BlockSpec((1, dim), lambda i, k: (0, 0)),     # b2
            ],
            out_specs=pl.BlockSpec((tm, dim), lambda i, k: (i, 0)),
            scratch_shapes=[
                pltpu.VMEM((tm, dim), matmul_dtype),   # cached LayerNorm output
                pltpu.VMEM((tm, dim), jnp.float32),    # f32 output accumulator
            ],
        )
        kernel = _ff_kernel_chunked
        dim_sem = ("parallel", "arbitrary")

    out2d = pl.pallas_call(
        kernel,
        out_shape=jax.ShapeDtypeStruct((rows_p, dim), x.dtype),
        grid_spec=grid_spec,
        compiler_params=pltpu.CompilerParams(
            dimension_semantics=dim_sem,
            vmem_limit_bytes=vmem_limit,
        ),
    )(x2d, gamma2d, beta2d, w1p, b1_2d, w2p, b2_2d)

    return out2d[:rows].reshape(batch, seq, dim)


# --------------------------------------------------------------------------- #
# Parameters / reference
# --------------------------------------------------------------------------- #
def init_params(key, dim, hidden_dim):
    """Deterministic synthetic parameters with PyTorch-default-style init."""
    k1, k2, k3, k4 = jax.random.split(key, 4)
    gamma = jnp.ones((dim,), jnp.float32)
    beta = jnp.zeros((dim,), jnp.float32)
    # Linear(dim, hidden): torch stores weight (hidden, dim); we keep (dim, hidden)
    # for the x @ W layout — same math as x @ W_torch.T.
    bound1 = 1.0 / (dim ** 0.5)
    w1 = jax.random.uniform(k1, (dim, hidden_dim), jnp.float32, -bound1, bound1)
    b1 = jax.random.uniform(k2, (hidden_dim,), jnp.float32, -bound1, bound1)
    bound2 = 1.0 / (hidden_dim ** 0.5)
    w2 = jax.random.uniform(k3, (hidden_dim, dim), jnp.float32, -bound2, bound2)
    b2 = jax.random.uniform(k4, (dim,), jnp.float32, -bound2, bound2)
    return gamma, beta, w1, b1, w2, b2


def _reference(x, gamma, beta, w1, b1, w2, b2):
    xf = x.astype(jnp.float32)
    mean = jnp.mean(xf, axis=-1, keepdims=True)
    var = jnp.mean((xf - mean) ** 2, axis=-1, keepdims=True)
    xn = (xf - mean) / jnp.sqrt(var + LN_EPS) * gamma + beta
    h = xn @ w1 + b1
    h = 0.5 * h * (1.0 + jax.lax.erf(h * 0.7071067811865476))
    return h @ w2 + b2


if __name__ == "__main__":
    key = jax.random.PRNGKey(0)

    # --- Case 1: small shapes, fused path, f32 matmul (exact torch semantics) ---
    batch, seq, dim, hidden = 2, 8, 32, 64
    kx, kp, key = jax.random.split(key, 3)
    x = jax.random.normal(kx, (batch, seq, dim), jnp.float32)
    params = init_params(kp, dim, hidden)

    out = feed_forward(x, *params, matmul_dtype=jnp.float32)
    out = jax.block_until_ready(out)
    ref = _reference(x, *params)
    assert out.shape == x.shape
    assert jnp.allclose(out, ref, atol=1e-4, rtol=1e-4), "mismatch vs reference (f32)"

    # --- Case 2: row padding + forced hidden chunking + bf16 matmul operands ---
    batch2, seq2, dim2, hidden2 = 2, 13, 32, 192
    kx2, kp2, key = jax.random.split(key, 3)
    x2 = jax.random.normal(kx2, (batch2, seq2, dim2), jnp.float32)
    params2 = init_params(kp2, dim2, hidden2)

    out2 = feed_forward(x2, *params2, block_rows=256, hidden_chunk=128,
                        matmul_dtype=jnp.bfloat16)
    out2 = jax.block_until_ready(out2)
    ref2 = _reference(x2, *params2)
    assert out2.shape == x2.shape
    assert jnp.allclose(out2, ref2, atol=5e-2, rtol=5e-2), "mismatch vs reference (bf16)"

    # --- Case 3: lane-dense dims, adaptive chunk selection (fused, f32) ---
    batch3, seq3, dim3, hidden3 = 2, 64, 256, 1024
    kx3, kp3 = jax.random.split(key)
    x3 = jax.random.normal(kx3, (batch3, seq3, dim3), jnp.float32)
    params3 = init_params(kp3, dim3, hidden3)

    out3 = feed_forward(x3, *params3)
    out3 = jax.block_until_ready(out3)
    ref3 = _reference(x3, *params3)
    assert out3.shape == x3.shape
    assert jnp.allclose(out3, ref3, atol=1e-3, rtol=1e-3), "mismatch vs reference (f32, big)"

    print("KERNEL_OK")
</pallas_src>

<mosaic_0001>
module attributes {stable_mosaic.version = 11 : i64} {
  func.func @_ff_kernel_fused(%arg0: i32, %arg1: memref<16x32xf32, #tpu.memory_space<vmem>>, %arg2: memref<1x32xf32, #tpu.memory_space<vmem>>, %arg3: memref<1x32xf32, #tpu.memory_space<vmem>>, %arg4: memref<32x64xf32, #tpu.memory_space<vmem>>, %arg5: memref<1x64xf32, #tpu.memory_space<vmem>>, %arg6: memref<64x32xf32, #tpu.memory_space<vmem>>, %arg7: memref<1x32xf32, #tpu.memory_space<vmem>>, %arg8: memref<16x32xf32, #tpu.memory_space<vmem>>) attributes {dimension_semantics = [#tpu.dimension_semantics<parallel>], iteration_bounds = array<i64: 1>, scalar_prefetch = 0 : i64, scratch_operands = 0 : i64, tpu.core_type = #tpu.core_type<tc>, window_params = [{transform_indices = @transform_0, window_bounds = array<i64: 16, 32>}, {pipeline_mode = #tpu.pipeline_mode<synchronous>, transform_indices = @transform_1, window_bounds = array<i64: 1, 32>}, {pipeline_mode = #tpu.pipeline_mode<synchronous>, transform_indices = @transform_2, window_bounds = array<i64: 1, 32>}, {pipeline_mode = #tpu.pipeline_mode<synchronous>, transform_indices = @transform_3, window_bounds = array<i64: 32, 64>}, {pipeline_mode = #tpu.pipeline_mode<synchronous>, transform_indices = @transform_4, window_bounds = array<i64: 1, 64>}, {pipeline_mode = #tpu.pipeline_mode<synchronous>, transform_indices = @transform_5, window_bounds = array<i64: 64, 32>}, {pipeline_mode = #tpu.pipeline_mode<synchronous>, transform_indices = @transform_6, window_bounds = array<i64: 1, 32>}, {transform_indices = @transform_7, window_bounds = array<i64: 16, 32>}]} {
    %c0 = arith.constant 0 : index
    %c0_0 = arith.constant 0 : index
    %0 = vector.load %arg1[%c0, %c0_0] : memref<16x32xf32, #tpu.memory_space<vmem>>, vector<16x32xf32>
    %cst = arith.constant dense<0.000000e+00> : vector<16xf32>
    %1 = vector.multi_reduction <add>, %0, %cst [1] : vector<16x32xf32> to vector<16xf32>
    %2 = vector.shape_cast %1 : vector<16xf32> to vector<16x1xf32>
    %cst_1 = arith.constant 3.200000e+01 : f32
    %3 = vector.broadcast %cst_1 : f32 to vector<16x1xf32>
    %4 = arith.divf %2, %3 : vector<16x1xf32>
    %5 = vector.broadcast %4 : vector<16x1xf32> to vector<16x32xf32>
    %6 = arith.subf %0, %5 : vector<16x32xf32>
    %7 = arith.mulf %6, %6 : vector<16x32xf32>
    %cst_2 = arith.constant dense<0.000000e+00> : vector<16xf32>
    %8 = vector.multi_reduction <add>, %7, %cst_2 [1] : vector<16x32xf32> to vector<16xf32>
    %9 = vector.shape_cast %8 : vector<16xf32> to vector<16x1xf32>
    %cst_3 = arith.constant 3.200000e+01 : f32
    %10 = vector.broadcast %cst_3 : f32 to vector<16x1xf32>
    %11 = arith.divf %9, %10 : vector<16x1xf32>
    %cst_4 = arith.constant 9.99999974E-6 : f32
    %12 = vector.broadcast %cst_4 : f32 to vector<16x1xf32>
    %13 = arith.addf %11, %12 : vector<16x1xf32>
    %14 = math.rsqrt %13 : vector<16x1xf32>
    %15 = vector.broadcast %14 : vector<16x1xf32> to vector<16x32xf32>
    %16 = arith.mulf %6, %15 : vector<16x32xf32>
    %c0_5 = arith.constant 0 : index
    %c0_6 = arith.constant 0 : index
    %17 = vector.load %arg2[%c0_5, %c0_6] : memref<1x32xf32, #tpu.memory_space<vmem>>, vector<1x32xf32>
    %18 = vector.broadcast %17 : vector<1x32xf32> to vector<16x32xf32>
    %19 = arith.mulf %16, %18 : vector<16x32xf32>
    %c0_7 = arith.constant 0 : index
    %c0_8 = arith.constant 0 : index
    %20 = vector.load %arg3[%c0_7, %c0_8] : memref<1x32xf32, #tpu.memory_space<vmem>>, vector<1x32xf32>
    %21 = vector.broadcast %20 : vector<1x32xf32> to vector<16x32xf32>
    %22 = arith.addf %19, %21 : vector<16x32xf32>
    %c0_9 = arith.constant 0 : index
    %c0_10 = arith.constant 0 : index
    %23 = vector.load %arg4[%c0_9, %c0_10] : memref<32x64xf32, #tpu.memory_space<vmem>>, vector<32x64xf32>
    %cst_11 = arith.constant dense<0.000000e+00> : vector<16x64xf32>
    %24 = tpu.matmul %22, %23, %cst_11 {dimension_numbers = #tpu.dot_dimension_numbers<[1], [0], [0], [1], [0, 0, 1, 1], [], []>} : vector<16x32xf32>, vector<32x64xf32>, vector<16x64xf32> -> vector<16x64xf32>
    %c0_12 = arith.constant 0 : index
    %c0_13 = arith.constant 0 : index
    %25 = vector.load %arg5[%c0_12, %c0_13] : memref<1x64xf32, #tpu.memory_space<vmem>>, vector<1x64xf32>
    %26 = vector.broadcast %25 : vector<1x64xf32> to vector<16x64xf32>
    %27 = arith.addf %24, %26 : vector<16x64xf32>
    %cst_14 = arith.constant 5.000000e-01 : f32
    %28 = vector.broadcast %cst_14 : f32 to vector<16x64xf32>
    %29 = arith.mulf %28, %27 : vector<16x64xf32>
    %cst_15 = arith.constant 0.707106769 : f32
    %30 = vector.broadcast %cst_15 : f32 to vector<16x64xf32>
    %31 = arith.mulf %27, %30 : vector<16x64xf32>
    %32 = math.erf %31 : vector<16x64xf32>
    %cst_16 = arith.constant 1.000000e+00 : f32
    %33 = vector.broadcast %cst_16 : f32 to vector<16x64xf32>
    %34 = arith.addf %33, %32 : vector<16x64xf32>
    %35 = arith.mulf %29, %34 : vector<16x64xf32>
    %c0_17 = arith.constant 0 : index
    %c0_18 = arith.constant 0 : index
    %36 = vector.load %arg6[%c0_17, %c0_18] : memref<64x32xf32, #tpu.memory_space<vmem>>, vector<64x32xf32>
    %cst_19 = arith.constant dense<0.000000e+00> : vector<16x32xf32>
    %37 = tpu.matmul %35, %36, %cst_19 {dimension_numbers = #tpu.dot_dimension_numbers<[1], [0], [0], [1], [0, 0, 1, 1], [], []>} : vector<16x64xf32>, vector<64x32xf32>, vector<16x32xf32> -> vector<16x32xf32>
    %c0_20 = arith.constant 0 : index
    %c0_21 = arith.constant 0 : index
    %38 = vector.load %arg7[%c0_20, %c0_21] : memref<1x32xf32, #tpu.memory_space<vmem>>, vector<1x32xf32>
    %39 = vector.broadcast %38 : vector<1x32xf32> to vector<16x32xf32>
    %40 = arith.addf %37, %39 : vector<16x32xf32>
    %c0_22 = arith.constant 0 : index
    %c0_23 = arith.constant 0 : index
    %41 = vector.load %arg8[%c0_22, %c0_23] : memref<16x32xf32, #tpu.memory_space<vmem>>, vector<16x32xf32>
    tpu.vector_store %arg8[%c0_22, %c0_23], %40 {strides = array<i32>} : memref<16x32xf32, #tpu.memory_space<vmem>>, vector<16x32xf32>,
    return
  }
  func.func @transform_0(%arg0: i32) -> (i32, i32) {
    %c0_i32 = arith.constant 0 : i32
    %c0_i32_0 = arith.constant 0 : i32
    return %arg0, %c0_i32 : i32, i32
  }
  func.func @transform_1(%arg0: i32) -> (i32, i32) {
    %c0_i32 = arith.constant 0 : i32
    %c0_i32_0 = arith.constant 0 : i32
    %c0_i32_1 = arith.constant 0 : i32
    return %c0_i32, %c0_i32_0 : i32, i32
  }
  func.func @transform_2(%arg0: i32) -> (i32, i32) {
    %c0_i32 = arith.constant 0 : i32
    %c0_i32_0 = arith.constant 0 : i32
    %c0_i32_1 = arith.constant 0 : i32
    return %c0_i32, %c0_i32_0 : i32, i32
  }
  func.func @transform_3(%arg0: i32) -> (i32, i32) {
    %c0_i32 = arith.constant 0 : i32
    %c0_i32_0 = arith.constant 0 : i32
    %c0_i32_1 = arith.constant 0 : i32
    return %c0_i32, %c0_i32_0 : i32, i32
  }
  func.func @transform_4(%arg0: i32) -> (i32, i32) {
    %c0_i32 = arith.constant 0 : i32
    %c0_i32_0 = arith.constant 0 : i32
    %c0_i32_1 = arith.constant 0 : i32
    return %c0_i32, %c0_i32_0 : i32, i32
  }
  func.func @transform_5(%arg0: i32) -> (i32, i32) {
    %c0_i32 = arith.constant 0 : i32
    %c0_i32_0 = arith.constant 0 : i32
    %c0_i32_1 = arith.constant 0 : i32
    return %c0_i32, %c0_i32_0 : i32, i32
  }
  func.func @transform_6(%arg0: i32) -> (i32, i32) {
    %c0_i32 = arith.constant 0 : i32
    %c0_i32_0 = arith.constant 0 : i32
    %c0_i32_1 = arith.constant 0 : i32
    return %c0_i32, %c0_i32_0 : i32, i32
  }
  func.func @transform_7(%arg0: i32) -> (i32, i32) {
    %c0_i32 = arith.constant 0 : i32
    %c0_i32_0 = arith.constant 0 : i32
    return %arg0, %c0_i32 : i32, i32
  }
}

</mosaic_0001>

<llo_original>
// kernel: feed_forward.1
$region0: #{feed_forward.1}
  #allocation0 [shape = 'u32[]', space=smem, size = 0x4, offset = 0x4, fixed_abs, tag = 'smem constant byte address 0x4 - core index']
  #allocation1 [shape = 'u32[144,128]{1,0:T(1,128)}', space=vmem, size = 0x12000, scoped, tag = 'internal scratch']
  %s0 = inlined_call_operand.vmem [shape: f32[16,32], index: 0, kind: input, shape index: {}]
  %s1 = inlined_call_operand.vmem [shape: f32[1,32], index: 1, kind: input, shape index: {}]
  %s2 = inlined_call_operand.vmem [shape: f32[1,32], index: 2, kind: input, shape index: {}]
  %s3 = inlined_call_operand.vmem [shape: f32[32,64], index: 3, kind: input, shape index: {}]
  %s4 = inlined_call_operand.vmem [shape: f32[1,64], index: 4, kind: input, shape index: {}]
  %s5 = inlined_call_operand.vmem [shape: f32[64,32], index: 5, kind: input, shape index: {}]
  %s6 = inlined_call_operand.vmem [shape: f32[1,32], index: 6, kind: input, shape index: {}]
  %s7 = inlined_call_operand.hbm [shape: f32[16,32], index: 7, kind: output, shape index: {}]
  %s8 = sld [smem:[#allocation0]]
  $region38: #{feed_forward.1} parent=0
    _
  %s10 = ssub.s32 1, %s8
  %s11 = scalar_select 0, %s10, %s8
  $region1: #{feed_forward.1} parent=0
    #allocation2 [shape = 'u8[8192]{0}', space=vmem, size = 0x2000, scoped, tag = 'output window, operand 0, single buffered']
    #allocation3 [shape = 's32[1]{0}', space=sflag, size = 0x4, scoped, tag = 'scoped memory for feed_forward.1']
    %12 = vsyncpa [#allocation3], 0
    // Predicated region
    $region2: #{feed_forward.1} parent=1 // pred_check
      _
    $region3: #{feed_forward.1} parent=1 // pred_check_branch
      %14 = sbr.rel (0) target = $region5
    $region4: #{feed_forward.1} parent=1 // pred_region
      _
    $region5: #{feed_forward.1} parent=1 // pred_fallthru
      _
    // Predicated region
    $region6: #{feed_forward.1} parent=1 // pred_check
      _
    $region7: #{feed_forward.1} parent=1 // pred_check_branch
      %16 = sbr.rel (0) target = $region9
    $region8: #{feed_forward.1} parent=1 // pred_region
      _
    $region9: #{feed_forward.1} parent=1 // pred_fallthru
      _
    // Predicated region
    $region10: #{feed_forward.1} parent=1 // pred_check
      _
    $region11: #{feed_forward.1} parent=1 // pred_check_branch
      %18 = sbr.rel (0) target = $region13
    $region12: #{feed_forward.1} parent=1 // pred_region
      _
    $region13: #{feed_forward.1} parent=1 // pred_fallthru
      _
    // Predicated region
    $region14: #{feed_forward.1} parent=1 // pred_check
      _
    $region15: #{feed_forward.1} parent=1 // pred_check_branch
      %20 = sbr.rel (0) target = $region17
    $region16: #{feed_forward.1} parent=1 // pred_region
      _
    $region17: #{feed_forward.1} parent=1 // pred_fallthru
      _
    // Predicated region
    $region18: #{feed_forward.1} parent=1 // pred_check
      _
    $region19: #{feed_forward.1} parent=1 // pred_check_branch
      %22 = sbr.rel (0) target = $region21
    $region20: #{feed_forward.1} parent=1 // pred_region
      _
    $region21: #{feed_forward.1} parent=1 // pred_fallthru
      _
    // Predicated region
    $region22: #{feed_forward.1} parent=1 // pred_check
      _
    $region23: #{feed_forward.1} parent=1 // pred_check_branch
      %24 = sbr.rel (0) target = $region25
    $region24: #{feed_forward.1} parent=1 // pred_region
      _
    $region25: #{feed_forward.1} parent=1 // pred_fallthru
      _
    // Predicated region
    $region26: #{feed_forward.1} parent=1 // pred_check
      _
    $region27: #{feed_forward.1} parent=1 // pred_check_branch
      %26 = sbr.rel (0) target = $region29
    $region28: #{feed_forward.1} parent=1 // pred_region
      _
    $region29: #{feed_forward.1} parent=1 // pred_fallthru
      _
    %v27 = vld [vmem:[%s0] sm:$0xff]
    %v28 = vld [vmem:[%s0 + $0x8] sm:$0xff]
    %vm29 = vcmask 261120
    %v30 = vsel %vm29, %v27, 0.0
    %31 = vadd.xlane.f32.xlu0 %v30
    %v32 = vpop.xlane.xlu0 %31
    %v33 = vsel %vm29, %v28, 0.0
    %34 = vadd.xlane.f32.xlu0 %v33
    %v35 = vpop.xlane.xlu0 %34
    %v36 = vrcp.pop 32.0
    %v37 = vmul.f32 %v32, %v36
    %v38 = vmul.f32 %v35, %v36
    %v39 = vsub.f32 %v27, %v37
    %v40 = vsub.f32 %v28, %v38
    %v41 = vmul.f32 %v39, %v39
    %v42 = vmul.f32 %v40, %v40
    %v43 = vsel %vm29, %v41, 0.0
    %44 = vadd.xlane.f32.xlu0 %v43
    %v45 = vpop.xlane.xlu0 %44
    %v46 = vsel %vm29, %v42, 0.0
    %47 = vadd.xlane.f32.xlu0 %v46
    %v48 = vpop.xlane.xlu0 %47
    %v49 = vmul.f32 %v45, %v36
    %v50 = vmul.f32 %v48, %v36
    %v51 = vadd.f32 %v49, 1e-05
    %v52 = vadd.f32 %v50, 1e-05
    %v53 = vrsqrt.pop %v51
    %v54 = vrsqrt.pop %v52
    %v55 = vmul.f32 %v39, %v53
    %v56 = vmul.f32 %v40, %v54
    %v57 = vld [vmem:[%s1] sm:$0x1]
    %v59 = vlaneseq
    %v60 = vshrl.u32 %v59, 7
    %v61 = vsub.s32 0, %v60
    %v62 = vrot.slane %v57, %v61
    %v64 = vmul.f32 %v55, %v62
    %v65 = vmul.f32 %v56, %v62
    %v66 = vld [vmem:[%s2] sm:$0x1]
    %v68 = vlaneseq
    %v69 = vshrl.u32 %v68, 7
    %v70 = vsub.s32 0, %v69
    %v71 = vrot.slane %v66, %v70
    %v73 = vadd.f32 %v64, %v71
    %v74 = vadd.f32 %v65, %v71
    %v75 = vld [vmem:[%s3] sm:$0xff]
    %v76 = vld [vmem:[%s3 + $0x8] sm:$0xff]
    %v77 = vld [vmem:[%s3 + $0x10] sm:$0xff]
    %v78 = vld [vmem:[%s3 + $0x18] sm:$0xff]
    %v79 = vld [vmem:[%s4] sm:$0x1]
    %v81 = vlaneseq
    %v82 = vshrl.u32 %v81, 7
    %v83 = vsub.s32 0, %v82
    %v84 = vrot.slane %v79, %v83
    %v87 = vsel %vm29, %v73, 0
    %v90 = vsel %vm29, %v74, 0
    %92 = vmatprep.subr.mxu0 0.0
    %93 = vmatpush1.msra.mxu0 %v75
    %94 = vmatprep.subr.mxu0 0.0
    %95 = vmatpush1.msra.mxu0 %v76
    %96 = vmatprep.subr.mxu0 0.0
    %97 = vmatpush1.msra.mxu0 %v77
    %98 = vmatprep.subr.mxu0 0.0
    %99 = vmatpush1.msra.mxu0 %v78
    %100 = vmatprep.subr.mxu0 0.0
    %101 = vmatpush1.msra.mxu0 0.0
    %102 = vmatprep.subr.mxu0 0.0
    %103 = vmatpush1.msra.mxu0 0.0
    %104 = vmatprep.subr.mxu0 0.0
    %105 = vmatpush1.msra.mxu0 0.0
    %106 = vmatprep.subr.mxu0 0.0
    %107 = vmatpush1.msra.mxu0 0.0
    %108 = vmatprep.subr.mxu0 0.0
    %109 = vmatpush1.msra.mxu0 0.0
    %110 = vmatprep.subr.mxu0 0.0
    %111 = vmatpush1.msra.mxu0 0.0
    %112 = vmatprep.subr.mxu0 0.0
    %113 = vmatpush1.msra.mxu0 0.0
    %114 = vmatprep.subr.mxu0 0.0
    %115 = vmatpush1.msra.mxu0 0.0
    %116 = vmatprep.subr.mxu0 0.0
    %117 = vmatpush1.msra.mxu0 0.0
    %118 = vmatprep.subr.mxu0 0.0
    %119 = vmatpush1.msra.mxu0 0.0
    %120 = vmatprep.subr.mxu0 0.0
    %121 = vmatpush1.msra.mxu0 0.0
    %122 = vmatprep.subr.mxu0 0.0
    %123 = vmatpush1.msra.mxu0 0.0
    %124 = vmatprep.subr.mxu0 0.0
    %125 = vmatpush1.msra.mxu0 0.0
    %126 = vmatprep.subr.mxu0 0.0
    %127 = vmatpush1.msra.mxu0 0.0
    %128 = vmatprep.subr.mxu0 0.0
    %129 = vmatpush1.msra.mxu0 0.0
    %130 = vmatprep.subr.mxu0 0.0
    %131 = vmatpush1.msra.mxu0 0.0
    %132 = vmatprep.subr.mxu0 0.0
    %133 = vmatpush1.msra.mxu0 0.0
    %134 = vmatprep.subr.mxu0 0.0
    %135 = vmatpush1.msra.mxu0 0.0
    %136 = vmatprep.subr.mxu0 0.0
    %137 = vmatpush1.msra.mxu0 0.0
    %138 = vmatprep.subr.mxu0 0.0
    %139 = vmatpush1.msra.mxu0 0.0
    %140 = vmatprep.subr.mxu0 0.0
    %141 = vmatpush1.msra.mxu0 0.0
    %142 = vmatprep.subr.mxu0 0.0
    %143 = vmatpush1.msra.mxu0 0.0
    %144 = vmatprep.subr.mxu0 0.0
    %145 = vmatpush1.msra.mxu0 0.0
    %146 = vmatprep.subr.mxu0 0.0
    %147 = vmatpush1.msra.mxu0 0.0
    %148 = vmatprep.subr.mxu0 0.0
    %149 = vmatpush1.msra.mxu0 0.0
    %150 = vmatprep.subr.mxu0 0.0
    %151 = vmatpush1.msra.mxu0 0.0
    %152 = vmatprep.subr.mxu0 0.0
    %153 = vmatpush1.msra.mxu0 0.0
    %154 = vmatprep.subr.mxu0 0.0
    %155 = vmatpush1.msra.mxu0 0.0
    %156 = vmatprep.mubr.f32.mxu0 0.0
    %157 = vmatmul.mubr.f32.gmra.mrb[0].mxu0 %v87
    %v158 = vpop.f32.mrb[0].mxu0
    %v159 = vadd.f32 %v84, %v158
    %v160 = vpop.f32.mrb[0].mxu0
    %161 = vmatprep.mubr.f32.mxu0 0.0
    %162 = vmatmul.mubr.f32.gmra.mrb[0].mxu0 %v90
    %v163 = vpop.f32.mrb[0].mxu0
    %v164 = vadd.f32 %v84, %v163
    %v165 = vpop.f32.mrb[0].mxu0
    %166 = vdwg.mxu0
    %v167 = vmul.f32 %v159, 0.5
    %v168 = vmul.f32 %v164, 0.5
    %v169 = vmul.f32 %v159, 0.70710677
    %v170 = vmul.f32 %v164, 0.70710677
    %v171 = verf.f32.pop %v169
    %v172 = verf.f32.pop %v170
    %v173 = vadd.f32 %v171, 1.0
    %v174 = vadd.f32 %v172, 1.0
    %v175 = vmul.f32 %v167, %v173
    %v176 = vmul.f32 %v168, %v174
    %v177 = vld [vmem:[%s5] sm:$0xff]
    %v178 = vld [vmem:[%s5 + $0x8] sm:$0xff]
    %v179 = vld [vmem:[%s5 + $0x10] sm:$0xff]
    %v180 = vld [vmem:[%s5 + $0x18] sm:$0xff]
    %v181 = vld [vmem:[%s5 + $0x20] sm:$0xff]
    %v182 = vld [vmem:[%s5 + $0x28] sm:$0xff]
    %v183 = vld [vmem:[%s5 + $0x30] sm:$0xff]
    %v184 = vld [vmem:[%s5 + $0x38] sm:$0xff]
    %v185 = vld [vmem:[%s6] sm:$0x1]
    %v187 = vlaneseq
    %v188 = vshrl.u32 %v187, 7
    %v189 = vsub.s32 0, %v188
    %v190 = vrot.slane %v185, %v189
    %vm192 = vcmask 523264
    %v194 = vsel %vm192, %v175, 0
    %v197 = vsel %vm192, %v176, 0
    %199 = vmatprep.subr.mxu0 0.0
    %200 = vmatpush1.msra.mxu0 %v177
    %201 = vmatprep.subr.mxu0 0.0
    %202 = vmatpush1.msra.mxu0 %v178
    %203 = vmatprep.subr.mxu0 0.0
    %204 = vmatpush1.msra.mxu0 %v179
    %205 = vmatprep.subr.mxu0 0.0
    %206 = vmatpush1.msra.mxu0 %v180
    %207 = vmatprep.subr.mxu0 0.0
    %208 = vmatpush1.msra.mxu0 %v181
    %209 = vmatprep.subr.mxu0 0.0
    %210 = vmatpush1.msra.mxu0 %v182
    %211 = vmatprep.subr.mxu0 0.0
    %212 = vmatpush1.msra.mxu0 %v183
    %213 = vmatprep.subr.mxu0 0.0
    %214 = vmatpush1.msra.mxu0 %v184
    %215 = vmatprep.subr.mxu0 0.0
    %216 = vmatpush1.msra.mxu0 0.0
    %217 = vmatprep.subr.mxu0 0.0
    %218 = vmatpush1.msra.mxu0 0.0
    %219 = vmatprep.subr.mxu0 0.0
    %220 = vmatpush1.msra.mxu0 0.0
    %221 = vmatprep.subr.mxu0 0.0
    %222 = vmatpush1.msra.mxu0 0.0
    %223 = vmatprep.subr.mxu0 0.0
    %224 = vmatpush1.msra.mxu0 0.0
    %225 = vmatprep.subr.mxu0 0.0
    %226 = vmatpush1.msra.mxu0 0.0
    %227 = vmatprep.subr.mxu0 0.0
    %228 = vmatpush1.msra.mxu0 0.0
    %229 = vmatprep.subr.mxu0 0.0
    %230 = vmatpush1.msra.mxu0 0.0
    %231 = vmatprep.subr.mxu0 0.0
    %232 = vmatpush1.msra.mxu0 0.0
    %233 = vmatprep.subr.mxu0 0.0
    %234 = vmatpush1.msra.mxu0 0.0
    %235 = vmatprep.subr.mxu0 0.0
    %236 = vmatpush1.msra.mxu0 0.0
    %237 = vmatprep.subr.mxu0 0.0
    %238 = vmatpush1.msra.mxu0 0.0
    %239 = vmatprep.subr.mxu0 0.0
    %240 = vmatpush1.msra.mxu0 0.0
    %241 = vmatprep.subr.mxu0 0.0
    %242 = vmatpush1.msra.mxu0 0.0
    %243 = vmatprep.subr.mxu0 0.0
    %244 = vmatpush1.msra.mxu0 0.0
    %245 = vmatprep.subr.mxu0 0.0
    %246 = vmatpush1.msra.mxu0 0.0
    %247 = vmatprep.subr.mxu0 0.0
    %248 = vmatpush1.msra.mxu0 0.0
    %249 = vmatprep.subr.mxu0 0.0
    %250 = vmatpush1.msra.mxu0 0.0
    %251 = vmatprep.subr.mxu0 0.0
    %252 = vmatpush1.msra.mxu0 0.0
    %253 = vmatprep.subr.mxu0 0.0
    %254 = vmatpush1.msra.mxu0 0.0
    %255 = vmatprep.subr.mxu0 0.0
    %256 = vmatpush1.msra.mxu0 0.0
    %257 = vmatprep.subr.mxu0 0.0
    %258 = vmatpush1.msra.mxu0 0.0
    %259 = vmatprep.subr.mxu0 0.0
    %260 = vmatpush1.msra.mxu0 0.0
    %261 = vmatprep.subr.mxu0 0.0
    %262 = vmatpush1.msra.mxu0 0.0
    %263 = vmatprep.mubr.f32.mxu0 0.0
    %264 = vmatmul.mubr.f32.gmra.mrb[0].mxu0 %v194
    %v265 = vpop.f32.mrb[0].mxu0
    %v266 = vadd.f32 %v190, %v265
    %v267 = vpop.f32.mrb[0].mxu0
    %268 = vmatprep.mubr.f32.mxu0 0.0
    %269 = vmatmul.mubr.f32.gmra.mrb[0].mxu0 %v197
    %v270 = vpop.f32.mrb[0].mxu0
    %v271 = vadd.f32 %v190, %v270
    %v272 = vpop.f32.mrb[0].mxu0
    %273 = vdwg.mxu0
    %274 = vst.msk [vmem:[#allocation2] sm:$0xff] %vm29, %v266
    %275 = vst.msk [vmem:[#allocation2 + $0x8] sm:$0xff] %vm29, %v271
    // Predicated region
    $region30: #{feed_forward.1} parent=1 // pred_check
      _
    $region31: #{feed_forward.1} parent=1 // pred_check_branch
      %277 = sbr.rel (0) target = $region33
    $region32: #{feed_forward.1} parent=1 // pred_region
      %s279 = ssub.s32 256, 256
      %280 = vsyncadd [#allocation3], %s279
      %s281 = sshll.u32 [#allocation2], 4
      %s282 = int_to_ptr.vmem [resolvable:$true] %s281
      %287 = dma.vmem_to_hbm [thread:$0]  %s282, 256, %s7, [#allocation3], 128, 128, 8
    $region33: #{feed_forward.1} parent=1 // pred_fallthru
      _
    // Predicated region
    $region34: #{feed_forward.1} parent=1 // pred_check
      _
    $region35: #{feed_forward.1} parent=1 // pred_check_branch
      %289 = sbr.rel (0) target = $region37
    $region36: #{feed_forward.1} parent=1 // pred_region
      %290 = dma.done [#allocation3], 256
    $region37: #{feed_forward.1} parent=1 // pred_fallthru
      _
    %291 = vsyncpa [#allocation3], 1

</llo_original>
